<compile_context>
chip_gen: v7x
topology: tpu7x:2x2x1
jax: 0.10.0
libtpu: 0.0.40
codegen_flags: <defaults>
</compile_context>

<pallas_src>
import jax
import jax.numpy as jnp
from jax.experimental import pallas as pl
from jax.experimental.pallas import tpu as pltpu


def _round_up(n, m):
    return (n + m - 1) // m * m


def _vmem_budget_bytes():
    """Generation-aware working-set budget (~60% of physical VMEM)."""
    phys = 64 << 20  # conservative fallback (v7x per-TensorCore VMEM)
    try:
        phys = int(pltpu.get_tpu_info().vmem_capacity_bytes)
    except Exception:
        pass
    return min(int(phys * 0.6), 96 << 20)


def _divisor_tile(full, gran, cap):
    """Largest divisor of `full` that is a multiple of `gran` and <= cap.

    `full` is always a multiple of `gran`, so `gran` is a valid fallback.
    """
    cap = max(gran, min(cap, full))
    d = (cap // gran) * gran
    while d > gran:
        if full % d == 0:
            return d
        d -= gran
    return gran


def _select_tiles(Bp, Cp, Dp, in_bytes, budget, gran_m):
    """Pick (tm, tn, tk) as divisors of the padded dims, grown to the VMEM budget."""

    def footprint(tm, tn, tk):
        return (2 * (tm * tk + tk * tn) * in_bytes   # x + weight, double-buffered
                + 2 * tn * 4                          # bias
                + 2 * tm * tn * 4)                    # f32 output block (= accumulator)

    # 1) Lane-dense output / full-C weight tile when it fits (classifier heads
    #    typically have a small num_classes, so this is usually the whole N).
    tn = _divisor_tile(Cp, 128, Cp)
    while tn > 128 and footprint(gran_m, tn, 128) > budget:
        tn = _divisor_tile(Cp, 128, tn - 128)

    # 2) Deepest K next: tk == Dp removes the reduction loop entirely and keeps
    #    the weight tile VMEM-resident (re-used across all M blocks, no re-DMA).
    tk = _divisor_tile(Dp, 128, Dp)
    while tk > 128 and footprint(gran_m, tn, tk) > budget:
        tk = _divisor_tile(Dp, 128, tk - 128)

    # 3) Biggest M that still fits.  With a single N block, keep >= 2 M blocks so
    #    v7x's two TensorCores both get work (harmless on v5e/v6e).
    tm_cap = Bp
    if (Cp // tn) == 1 and Bp >= 2 * gran_m:
        tm_cap = Bp // 2
    tm = _divisor_tile(Bp, gran_m, tm_cap)
    while tm > gran_m and footprint(tm, tn, tk) > budget:
        tm = _divisor_tile(Bp, gran_m, tm - gran_m)

    return tm, tn, tk


def _cost(B, D, C, in_bytes):
    return pl.CostEstimate(
        flops=2 * B * D * C,
        transcendentals=0,
        bytes_accessed=in_bytes * (B * D + C * D) + 4 * (B * C + C),
    )


# ---------------------------------------------------------------------------
# Kernel: (M, N, K) grid; the f32 output block is the K-resident accumulator.
# ---------------------------------------------------------------------------
def _linear_kernel(x_ref, w_ref, b_ref, o_ref):
    k = pl.program_id(2)
    # MXU-native (tm, tk) x (tk, tn); the weight was transposed to (D, C) once
    # at prepare time, so there is no per-step weight-tile transpose.
    partial = jnp.dot(x_ref[...], w_ref[...], preferred_element_type=jnp.float32)

    @pl.when(k == 0)
    def _():
        o_ref[...] = b_ref[...] + partial        # bias (1, tn) broadcasts over (tm, tn)

    @pl.when(k > 0)
    def _():
        o_ref[...] += partial


def prepare_params(weight, bias, *, use_bf16_matmul=False):
    """One-time parameter preprocessing (hoisted out of the per-call path)."""
    C, D = weight.shape
    assert bias.shape == (C,)
    Dp, Cp = _round_up(D, 128), _round_up(C, 128)
    w = jnp.pad(weight.T, ((0, Dp - D), (0, Cp - C)))          # (Dp, Cp)
    if use_bf16_matmul:
        w = w.astype(jnp.bfloat16)
    b = jnp.pad(bias, (0, Cp - C)).reshape(1, Cp).astype(jnp.float32)
    return dict(weight=w, bias=b, D=D, C=C, use_bf16=use_bf16_matmul)


def linear_forward(x, params, *, vmem_budget_bytes=None):
    """y = x @ weight.T + bias with pre-prepared params (see prepare_params)."""
    B, D = x.shape
    assert D == params["D"]
    C = params["C"]
    w, b = params["weight"], params["bias"]
    Dp, Cp = w.shape
    use_bf16 = params["use_bf16"]

    in_dtype = jnp.bfloat16 if use_bf16 else jnp.float32
    in_bytes = 2 if use_bf16 else 4
    gran_m = 16 if use_bf16 else 8                # sublane packing granularity

    # Per-call activation prep: cast in the WRAPPER (not the kernel) and pad to
    # the (gran_m, 128) grid so padding waste is bounded by 8/16 rows, 128 lanes.
    Bp = _round_up(B, gran_m)
    xp = x.astype(in_dtype)
    if Bp != B or Dp != D:
        xp = jnp.pad(xp, ((0, Bp - B), (0, Dp - D)))

    budget = vmem_budget_bytes or _vmem_budget_bytes()
    tm, tn, tk = _select_tiles(Bp, Cp, Dp, in_bytes, budget, gran_m)
    grid = (Bp // tm, Cp // tn, Dp // tk)

    out = pl.pallas_call(
        _linear_kernel,
        out_shape=jax.ShapeDtypeStruct((Bp, Cp), jnp.float32),
        grid_spec=pltpu.PrefetchScalarGridSpec(
            num_scalar_prefetch=0,
            grid=grid,
            in_specs=[
                pl.BlockSpec((tm, tk), lambda i, j, k: (i, k)),   # x tile
                pl.BlockSpec((tk, tn), lambda i, j, k: (k, j)),   # weight tile (D, C)
                pl.BlockSpec((1, tn), lambda i, j, k: (0, j)),    # bias tile
            ],
            out_specs=pl.BlockSpec((tm, tn), lambda i, j, k: (i, j)),
        ),
        compiler_params=pltpu.CompilerParams(
            dimension_semantics=("parallel", "parallel", "arbitrary"),
            vmem_limit_bytes=min(budget + (16 << 20), 112 << 20),
        ),
        cost_estimate=_cost(B, D, C, in_bytes),
    )(xp, w, b)

    if Bp != B or Cp != C:
        out = out[:B, :C]
    return out


def simple_classifier_forward(x, weight, bias, *, use_bf16_matmul=False):
    """Convenience wrapper matching the PyTorch signature.

    For repeated calls, do `p = prepare_params(weight, bias, ...)` once and call
    `linear_forward(x, p)` so the weight transpose / pad / cast is not redone
    (and re-streamed through HBM) on every forward.
    """
    params = prepare_params(weight, bias, use_bf16_matmul=use_bf16_matmul)
    return linear_forward(x, params)


def init_params(key, input_dim, num_classes):
    # nn.Linear default init: U(-1/sqrt(in), 1/sqrt(in))
    kw, kb = jax.random.split(key)
    bound = 1.0 / (input_dim ** 0.5)
    weight = jax.random.uniform(kw, (num_classes, input_dim), jnp.float32,
                                minval=-bound, maxval=bound)
    bias = jax.random.uniform(kb, (num_classes,), jnp.float32,
                              minval=-bound, maxval=bound)
    return weight, bias


if __name__ == "__main__":
    key = jax.random.PRNGKey(0)
    k_x, k_p, k_x2, k_p2 = jax.random.split(key, 4)

    # --- small shapes consistent with the module ---
    batch, input_dim, num_classes = 8, 32, 16
    x = jax.random.normal(k_x, (batch, input_dim), jnp.float32)
    weight, bias = init_params(k_p, input_dim, num_classes)

    out = jax.block_until_ready(simple_classifier_forward(x, weight, bias))
    ref = jnp.dot(x, weight.T, precision=jax.lax.Precision.HIGHEST) + bias
    assert out.shape == (batch, num_classes)
    assert jnp.allclose(out, ref, atol=1e-4, rtol=1e-4)

    # --- awkward shape: exercises divisor-based tiling + (8,128) padding ---
    B2, D2, C2 = 384, 640, 192
    x2 = jax.random.normal(k_x2, (B2, D2), jnp.float32)
    w2, b2 = init_params(k_p2, D2, C2)
    ref2 = jnp.dot(x2, w2.T, precision=jax.lax.Precision.HIGHEST) + b2

    p_f32 = prepare_params(w2, b2)
    out2 = jax.block_until_ready(linear_forward(x2, p_f32))
    assert out2.shape == (B2, C2)
    assert jnp.allclose(out2, ref2, atol=1e-3, rtol=1e-3)

    # --- bf16 operands in HBM (f32 accumulation): halves DMA bytes ---
    p_bf16 = prepare_params(w2, b2, use_bf16_matmul=True)
    out3 = jax.block_until_ready(linear_forward(x2, p_bf16))
    assert jnp.allclose(out3, ref2, atol=1e-1, rtol=1e-1)

    # TODO(synk): optional v7x-only fp8-weight path (per-channel scales folded
    # into the bias epilogue) is not implemented.

    print("KERNEL_OK")
</pallas_src>

<mosaic_0001>
module attributes {stable_mosaic.version = 11 : i64} {
  func.func @_linear_kernel(%arg0: i32, %arg1: i32, %arg2: i32, %arg3: memref<8x128xf32, #tpu.memory_space<vmem>>, %arg4: memref<128x128xf32, #tpu.memory_space<vmem>>, %arg5: memref<1x128xf32, #tpu.memory_space<vmem>>, %arg6: memref<8x128xf32, #tpu.memory_space<vmem>>) attributes {dimension_semantics = [#tpu.dimension_semantics<parallel>, #tpu.dimension_semantics<parallel>, #tpu.dimension_semantics<arbitrary>], iteration_bounds = array<i64: 1, 1, 1>, scalar_prefetch = 0 : i64, scratch_operands = 0 : i64, tpu.core_type = #tpu.core_type<tc>, window_params = [{transform_indices = @transform_0, window_bounds = array<i64: 8, 128>}, {transform_indices = @transform_1, window_bounds = array<i64: 128, 128>}, {transform_indices = @transform_2, window_bounds = array<i64: 1, 128>}, {transform_indices = @transform_3, window_bounds = array<i64: 8, 128>}]} {
    %c0 = arith.constant 0 : index
    %c0_0 = arith.constant 0 : index
    %0 = vector.load %arg3[%c0, %c0_0] : memref<8x128xf32, #tpu.memory_space<vmem>>, vector<8x128xf32>
    %c0_1 = arith.constant 0 : index
    %c0_2 = arith.constant 0 : index
    %1 = vector.load %arg4[%c0_1, %c0_2] : memref<128x128xf32, #tpu.memory_space<vmem>>, vector<128x128xf32>
    %cst = arith.constant dense<0.000000e+00> : vector<8x128xf32>
    %2 = tpu.matmul %0, %1, %cst {dimension_numbers = #tpu.dot_dimension_numbers<[1], [0], [0], [1], [0, 0, 1, 1], [], []>} : vector<8x128xf32>, vector<128x128xf32>, vector<8x128xf32> -> vector<8x128xf32>
    %c0_i32 = arith.constant 0 : i32
    %3 = arith.cmpi eq, %arg2, %c0_i32 : i32
    %4 = arith.extui %3 : i1 to i32
    %c0_i32_3 = arith.constant 0 : i32
    %5 = arith.cmpi ne, %4, %c0_i32_3 : i32
    scf.if %5 {
      %c0_6 = arith.constant 0 : index
      %c0_7 = arith.constant 0 : index
      %9 = vector.load %arg5[%c0_6, %c0_7] : memref<1x128xf32, #tpu.memory_space<vmem>>, vector<1x128xf32>
      %10 = vector.broadcast %9 : vector<1x128xf32> to vector<8x128xf32>
      %11 = arith.addf %10, %2 : vector<8x128xf32>
      %c0_8 = arith.constant 0 : index
      %c0_9 = arith.constant 0 : index
      %12 = vector.load %arg6[%c0_8, %c0_9] : memref<8x128xf32, #tpu.memory_space<vmem>>, vector<8x128xf32>
      tpu.vector_store %arg6[%c0_8, %c0_9], %11 {strides = array<i32>} : memref<8x128xf32, #tpu.memory_space<vmem>>, vector<8x128xf32>,
    } else {
    }
    %c0_i32_4 = arith.constant 0 : i32
    %6 = arith.cmpi sgt, %arg2, %c0_i32_4 : i32
    %7 = arith.extui %6 : i1 to i32
    %c0_i32_5 = arith.constant 0 : i32
    %8 = arith.cmpi ne, %7, %c0_i32_5 : i32
    scf.if %8 {
      %c0_6 = arith.constant 0 : index
      %c0_7 = arith.constant 0 : index
      %9 = vector.load %arg6[%c0_6, %c0_7] : memref<8x128xf32, #tpu.memory_space<vmem>>, vector<8x128xf32>
      %10 = arith.addf %9, %2 : vector<8x128xf32>
      %c0_8 = arith.constant 0 : index
      %c0_9 = arith.constant 0 : index
      %11 = vector.load %arg6[%c0_8, %c0_9] : memref<8x128xf32, #tpu.memory_space<vmem>>, vector<8x128xf32>
      tpu.vector_store %arg6[%c0_8, %c0_9], %10 {strides = array<i32>} : memref<8x128xf32, #tpu.memory_space<vmem>>, vector<8x128xf32>,
    } else {
    }
    return
  }
  func.func @transform_0(%arg0: i32, %arg1: i32, %arg2: i32) -> (i32, i32) {
    %c0_i32 = arith.constant 0 : i32
    return %arg0, %arg2 : i32, i32
  }
  func.func @transform_1(%arg0: i32, %arg1: i32, %arg2: i32) -> (i32, i32) {
    %c0_i32 = arith.constant 0 : i32
    return %arg2, %arg1 : i32, i32
  }
  func.func @transform_2(%arg0: i32, %arg1: i32, %arg2: i32) -> (i32, i32) {
    %c0_i32 = arith.constant 0 : i32
    %c0_i32_0 = arith.constant 0 : i32
    return %c0_i32, %arg1 : i32, i32
  }
  func.func @transform_3(%arg0: i32, %arg1: i32, %arg2: i32) -> (i32, i32) {
    %c0_i32 = arith.constant 0 : i32
    return %arg0, %arg1 : i32, i32
  }
}

</mosaic_0001>

<llo_original>
// kernel: tpu_custom_call.1
$region0: #{tpu_custom_call.1}
  #allocation0 [shape = 'u32[]', space=smem, size = 0x4, offset = 0x4, fixed_abs, tag = 'smem constant byte address 0x4 - core index']
  #allocation1 [shape = 'u32[144,128]{1,0:T(1,128)}', space=vmem, size = 0x12000, scoped, tag = 'internal scratch']
  %s0 = inlined_call_operand.hbm [shape: f32[8,128], index: 0, kind: input, shape index: {}]
  %s1 = inlined_call_operand.hbm [shape: f32[128,128], index: 1, kind: input, shape index: {}]
  %s2 = inlined_call_operand.vmem [shape: f32[1,128], index: 2, kind: input, shape index: {}]
  %s3 = inlined_call_operand.hbm [shape: f32[8,128], index: 3, kind: output, shape index: {}]
  %s4 = sld [smem:[#allocation0]]
  $region38: #{tpu_custom_call.1} parent=0
    _
  %s6 = ssub.s32 1, %s4
  %s7 = scalar_select 0, %s6, %s4
  $region1: #{tpu_custom_call.1} parent=0
    #allocation2 [shape = 'u8[4096]{0}', space=vmem, size = 0x1000, scoped, tag = 'input window, operand 0, single buffered']
    #allocation3 [shape = 's32[1]{0}', space=sflag, size = 0x4, scoped, tag = 'scoped memory for tpu_custom_call.1']
    #allocation4 [shape = 's32[1]{0}', space=sflag, size = 0x4, scoped, tag = 'scoped memory for tpu_custom_call.1']
    #allocation5 [shape = 'u8[65536]{0}', space=vmem, size = 0x10000, scoped, tag = 'input window, operand 1, single buffered']
    #allocation6 [shape = 's32[1]{0}', space=sflag, size = 0x4, scoped, tag = 'scoped memory for tpu_custom_call.1']
    #allocation7 [shape = 'u8[4096]{0}', space=vmem, size = 0x1000, scoped, tag = 'output window, operand 0, single buffered']
    %8 = vsyncpa [#allocation3], 0
    %9 = vsyncpa [#allocation6], 0
    %10 = vsyncpa [#allocation4], 0
    // Predicated region
    $region2: #{tpu_custom_call.1} parent=1 // pred_check
      _
    $region3: #{tpu_custom_call.1} parent=1 // pred_check_branch
      %12 = sbr.rel (0) target = $region5
    $region4: #{tpu_custom_call.1} parent=1 // pred_region
      %s14 = ssub.s32 128, 128
      %15 = vsyncadd [#allocation3], %s14
      %s17 = sshll.u32 [#allocation2], 4
      %s18 = int_to_ptr.vmem [resolvable:$true] %s17
      %20 = dma.hbm_to_vmem [thread:$0]  %s0, 128, %s18, [#allocation3]
    $region5: #{tpu_custom_call.1} parent=1 // pred_fallthru
      _
    // Predicated region
    $region6: #{tpu_custom_call.1} parent=1 // pred_check
      _
    $region7: #{tpu_custom_call.1} parent=1 // pred_check_branch
      %22 = sbr.rel (0) target = $region9
    $region8: #{tpu_custom_call.1} parent=1 // pred_region
      %s24 = ssub.s32 2048, 2048
      %25 = vsyncadd [#allocation6], %s24
      %s26 = sshll.u32 [#allocation5], 4
      %s27 = int_to_ptr.vmem [resolvable:$true] %s26
      %32 = dma.hbm_to_vmem [thread:$0]  %s1, 2048, %s27, [#allocation6], 128, 128, 8
    $region9: #{tpu_custom_call.1} parent=1 // pred_fallthru
      _
    // Predicated region
    $region10: #{tpu_custom_call.1} parent=1 // pred_check
      _
    $region11: #{tpu_custom_call.1} parent=1 // pred_check_branch
      %34 = sbr.rel (0) target = $region13
    $region12: #{tpu_custom_call.1} parent=1 // pred_region
      _
    $region13: #{tpu_custom_call.1} parent=1 // pred_fallthru
      _
    // Predicated region
    $region14: #{tpu_custom_call.1} parent=1 // pred_check
      _
    $region15: #{tpu_custom_call.1} parent=1 // pred_check_branch
      %36 = sbr.rel (0) target = $region17
    $region16: #{tpu_custom_call.1} parent=1 // pred_region
      %37 = dma.done [#allocation3], 128
    $region17: #{tpu_custom_call.1} parent=1 // pred_fallthru
      _
    // Predicated region
    $region18: #{tpu_custom_call.1} parent=1 // pred_check
      _
    $region19: #{tpu_custom_call.1} parent=1 // pred_check_branch
      %39 = sbr.rel (0) target = $region21
    $region20: #{tpu_custom_call.1} parent=1 // pred_region
      %40 = dma.done [#allocation6], 2048
    $region21: #{tpu_custom_call.1} parent=1 // pred_fallthru
      _
    %v41 = vld [vmem:[#allocation2] sm:$0xff]
    %v42 = vld [vmem:[#allocation5] sm:$0xff]
    %v43 = vld [vmem:[#allocation5 + $0x8] sm:$0xff]
    %v44 = vld [vmem:[#allocation5 + $0x10] sm:$0xff]
    %v45 = vld [vmem:[#allocation5 + $0x18] sm:$0xff]
    %v46 = vld [vmem:[#allocation5 + $0x20] sm:$0xff]
    %v47 = vld [vmem:[#allocation5 + $0x28] sm:$0xff]
    %v48 = vld [vmem:[#allocation5 + $0x30] sm:$0xff]
    %v49 = vld [vmem:[#allocation5 + $0x38] sm:$0xff]
    %v50 = vld [vmem:[#allocation5 + $0x40] sm:$0xff]
    %v51 = vld [vmem:[#allocation5 + $0x48] sm:$0xff]
    %v52 = vld [vmem:[#allocation5 + $0x50] sm:$0xff]
    %v53 = vld [vmem:[#allocation5 + $0x58] sm:$0xff]
    %v54 = vld [vmem:[#allocation5 + $0x60] sm:$0xff]
    %v55 = vld [vmem:[#allocation5 + $0x68] sm:$0xff]
    %v56 = vld [vmem:[#allocation5 + $0x70] sm:$0xff]
    %v57 = vld [vmem:[#allocation5 + $0x78] sm:$0xff]
    %58 = vmatprep.subr.mxu0 0.0
    %59 = vmatpush1.msra.mxu0 %v42
    %60 = vmatprep.subr.mxu0 0.0
    %61 = vmatpush1.msra.mxu0 %v43
    %62 = vmatprep.subr.mxu0 0.0
    %63 = vmatpush1.msra.mxu0 %v44
    %64 = vmatprep.subr.mxu0 0.0
    %65 = vmatpush1.msra.mxu0 %v45
    %66 = vmatprep.subr.mxu0 0.0
    %67 = vmatpush1.msra.mxu0 %v46
    %68 = vmatprep.subr.mxu0 0.0
    %69 = vmatpush1.msra.mxu0 %v47
    %70 = vmatprep.subr.mxu0 0.0
    %71 = vmatpush1.msra.mxu0 %v48
    %72 = vmatprep.subr.mxu0 0.0
    %73 = vmatpush1.msra.mxu0 %v49
    %74 = vmatprep.subr.mxu0 0.0
    %75 = vmatpush1.msra.mxu0 %v50
    %76 = vmatprep.subr.mxu0 0.0
    %77 = vmatpush1.msra.mxu0 %v51
    %78 = vmatprep.subr.mxu0 0.0
    %79 = vmatpush1.msra.mxu0 %v52
    %80 = vmatprep.subr.mxu0 0.0
    %81 = vmatpush1.msra.mxu0 %v53
    %82 = vmatprep.subr.mxu0 0.0
    %83 = vmatpush1.msra.mxu0 %v54
    %84 = vmatprep.subr.mxu0 0.0
    %85 = vmatpush1.msra.mxu0 %v55
    %86 = vmatprep.subr.mxu0 0.0
    %87 = vmatpush1.msra.mxu0 %v56
    %88 = vmatprep.subr.mxu0 0.0
    %89 = vmatpush1.msra.mxu0 %v57
    %90 = vmatprep.subr.mxu0 0.0
    %91 = vmatpush1.msra.mxu0 0.0
    %92 = vmatprep.subr.mxu0 0.0
    %93 = vmatpush1.msra.mxu0 0.0
    %94 = vmatprep.subr.mxu0 0.0
    %95 = vmatpush1.msra.mxu0 0.0
    %96 = vmatprep.subr.mxu0 0.0
    %97 = vmatpush1.msra.mxu0 0.0
    %98 = vmatprep.subr.mxu0 0.0
    %99 = vmatpush1.msra.mxu0 0.0
    %100 = vmatprep.subr.mxu0 0.0
    %101 = vmatpush1.msra.mxu0 0.0
    %102 = vmatprep.subr.mxu0 0.0
    %103 = vmatpush1.msra.mxu0 0.0
    %104 = vmatprep.subr.mxu0 0.0
    %105 = vmatpush1.msra.mxu0 0.0
    %106 = vmatprep.subr.mxu0 0.0
    %107 = vmatpush1.msra.mxu0 0.0
    %108 = vmatprep.subr.mxu0 0.0
    %109 = vmatpush1.msra.mxu0 0.0
    %110 = vmatprep.subr.mxu0 0.0
    %111 = vmatpush1.msra.mxu0 0.0
    %112 = vmatprep.subr.mxu0 0.0
    %113 = vmatpush1.msra.mxu0 0.0
    %114 = vmatprep.subr.mxu0 0.0
    %115 = vmatpush1.msra.mxu0 0.0
    %116 = vmatprep.subr.mxu0 0.0
    %117 = vmatpush1.msra.mxu0 0.0
    %118 = vmatprep.subr.mxu0 0.0
    %119 = vmatpush1.msra.mxu0 0.0
    %120 = vmatprep.subr.mxu0 0.0
    %121 = vmatpush1.msra.mxu0 0.0
    %122 = vmatprep.mubr.f32.mxu0 0.0
    %123 = vmatmul.mubr.f32.gmra.mrb[0].mxu0 %v41
    %v124 = vpop.f32.mrb[0].mxu0
    %v125 = vadd.f32 0.0, %v124
    %v126 = vpop.f32.mrb[0].mxu0
    %127 = vdwg.mxu0
    %p128 = scmp.eq.s32.totalorder 0, 0
    // Predicated region
    $region22: #{tpu_custom_call.1} parent=1 // pred_check
      %p129 = pneg %p128
    $region23: #{tpu_custom_call.1} parent=1 // pred_check_branch
      %131 = sbr.rel (%p129) target = $region25
    $region24: #{tpu_custom_call.1} parent=1 // pred_region
      %v132 = vld [vmem:[%s2] sm:$0x1]
      %v134 = vlaneseq
      %v135 = vshrl.u32 %v134, 7
      %v136 = vsub.s32 0, %v135
      %v137 = vrot.slane %v132, %v136
      %v139 = vadd.f32 %v137, %v125
      %140 = vst [vmem:[#allocation7] sm:$0xff] %v139
    $region25: #{tpu_custom_call.1} parent=1 // pred_fallthru
      _
    %p141 = scmp.gt.s32.totalorder 0, 0
    // Predicated region
    $region26: #{tpu_custom_call.1} parent=1 // pred_check
      %p142 = pneg %p141
    $region27: #{tpu_custom_call.1} parent=1 // pred_check_branch
      %144 = sbr.rel (%p142) target = $region29
    $region28: #{tpu_custom_call.1} parent=1 // pred_region
      %v145 = vld [vmem:[#allocation7] sm:$0xff]
      %v146 = vadd.f32 %v145, %v125
      %147 = vst [vmem:[#allocation7] sm:$0xff] %v146
    $region29: #{tpu_custom_call.1} parent=1 // pred_fallthru
      _
    // Predicated region
    $region30: #{tpu_custom_call.1} parent=1 // pred_check
      _
    $region31: #{tpu_custom_call.1} parent=1 // pred_check_branch
      %149 = sbr.rel (0) target = $region33
    $region32: #{tpu_custom_call.1} parent=1 // pred_region
      %s151 = ssub.s32 128, 128
      %152 = vsyncadd [#allocation4], %s151
      %s154 = sshll.u32 [#allocation7], 4
      %s155 = int_to_ptr.vmem [resolvable:$true] %s154
      %157 = dma.vmem_to_hbm [thread:$0]  %s155, 128, %s3, [#allocation4]
    $region33: #{tpu_custom_call.1} parent=1 // pred_fallthru
      _
    // Predicated region
    $region34: #{tpu_custom_call.1} parent=1 // pred_check
      _
    $region35: #{tpu_custom_call.1} parent=1 // pred_check_branch
      %159 = sbr.rel (0) target = $region37
    $region36: #{tpu_custom_call.1} parent=1 // pred_region
      %160 = dma.done [#allocation4], 128
    $region37: #{tpu_custom_call.1} parent=1 // pred_fallthru
      _
    %161 = vsyncpa [#allocation3], 1
    %162 = vsyncpa [#allocation6], 1
    %163 = vsyncpa [#allocation4], 1

</llo_original>
